<compile_context>
chip_gen: v7x
topology: tpu7x:2x2x1
jax: 0.10.0
libtpu: 0.0.40
codegen_flags: <defaults>
</compile_context>

<pallas_src>
import jax
import jax.numpy as jnp
from jax.experimental import pallas as pl
from jax.experimental.pallas import tpu as pltpu


def _round_up(x, m):
    return ((x + m - 1) // m) * m


# ----------------------------------------------------------------------------
# Pallas kernel: fused  relu(src@W1s + dest@W1d + ea@W1e + b1) @ W2 + b2
# ----------------------------------------------------------------------------
def _edge_mlp_kernel(src_ref, dest_ref, ea_ref,
                     w1s_ref, w1d_ref, w1e_ref, b1_ref,
                     w2_ref, b2_ref, o_ref):
    # cat([src, dest, edge_attr], 1) @ W1  ==  src@W1s + dest@W1d + ea@W1e
    h = jnp.dot(src_ref[...], w1s_ref[...], preferred_element_type=jnp.float32)
    h = h + jnp.dot(dest_ref[...], w1d_ref[...], preferred_element_type=jnp.float32)
    h = h + jnp.dot(ea_ref[...], w1e_ref[...], preferred_element_type=jnp.float32)
    h = h + b1_ref[...].astype(jnp.float32)
    h = jnp.maximum(h, 0.0)                                   # ReLU on the VPU
    # Cast h to the weight dtype so a bf16 W2 keeps the MXU in native mode;
    # accumulation stays f32.
    out = jnp.dot(h.astype(w2_ref.dtype), w2_ref[...],
                  preferred_element_type=jnp.float32)
    out = out + b2_ref[...].astype(jnp.float32)
    o_ref[...] = out.astype(o_ref.dtype)


# ----------------------------------------------------------------------------
# Wrapper: row streaming over an un-padded edge axis, resident weights
# ----------------------------------------------------------------------------
def edge_model_forward(src, dest, edge_attr, params, *, tm=4096, out_dtype=jnp.float32):
    """EdgeModel.forward — src/dest/edge_attr are (E, nf)/(E, nf)/(E, ne)."""
    w1, b1, w2, b2 = params          # w1: (2*nf+ne, H), b1: (1,H), w2: (H,nt), b2: (1,nt)
    E, nf = src.shape
    ne = edge_attr.shape[1]
    H = w1.shape[1]
    nt = w2.shape[1]

    # Weights follow the activation dtype (bf16 path halves weight bytes too);
    # biases stay f32 since they're added in the f32 accumulator.
    act_dtype = src.dtype
    w1 = w1.astype(act_dtype)
    w2 = w2.astype(act_dtype)

    # Fuse the concat by splitting W1 along its contraction axis.
    w1s, w1d, w1e = w1[:nf], w1[nf:2 * nf], w1[2 * nf:]

    # Row tile: large enough to amortize the ~0.35us per-grid-step overhead,
    # multiple of 8 (sublanes), capped so the grid keeps several steps for
    # v7x dual-TC sharding. No array padding: Pallas masks the partial tile.
    TM = max(8, min(tm, _round_up(pl.cdiv(E, 8), 8)))
    grid = (pl.cdiv(E, TM),)

    din = 2 * nf + ne
    in_bytes = jnp.dtype(act_dtype).itemsize
    out_bytes = jnp.dtype(out_dtype).itemsize
    cost = pl.CostEstimate(
        flops=2 * E * (din * H + H * nt),
        transcendentals=0,
        bytes_accessed=(in_bytes * (E * din + din * H + H * nt)
                        + 4 * (H + nt)
                        + out_bytes * E * nt),
    )

    out = pl.pallas_call(
        _edge_mlp_kernel,
        out_shape=jax.ShapeDtypeStruct((E, nt), out_dtype),
        grid=grid,
        in_specs=[
            # row-streamed activations (double-buffered by BlockSpec pipelining)
            pl.BlockSpec((TM, nf), lambda i: (i, 0)),
            pl.BlockSpec((TM, nf), lambda i: (i, 0)),
            pl.BlockSpec((TM, ne), lambda i: (i, 0)),
            # weights / biases: VMEM-resident across the whole grid
            pl.BlockSpec((nf, H), lambda i: (0, 0)),
            pl.BlockSpec((nf, H), lambda i: (0, 0)),
            pl.BlockSpec((ne, H), lambda i: (0, 0)),
            pl.BlockSpec((1, H), lambda i: (0, 0)),
            pl.BlockSpec((H, nt), lambda i: (0, 0)),
            pl.BlockSpec((1, nt), lambda i: (0, 0)),
        ],
        out_specs=pl.BlockSpec((TM, nt), lambda i: (i, 0)),
        compiler_params=pltpu.CompilerParams(
            # rows are independent -> megacore-shardable on v7x
            dimension_semantics=("parallel",),
        ),
        cost_estimate=cost,
    )(src, dest, edge_attr, w1s, w1d, w1e, b1, w2, b2)

    return out


# ----------------------------------------------------------------------------
# Parameter construction (deterministic, synthetic)
# ----------------------------------------------------------------------------
def linear_params(key, din, dout):
    kw, kb = jax.random.split(key)
    w = jax.random.normal(kw, (din, dout), jnp.float32) * 0.1
    b = jax.random.normal(kb, (1, dout), jnp.float32) * 0.01
    return w, b


def edge_model_params(key, n_node_features, n_edge_features, hiddens, n_targets):
    k1, k2 = jax.random.split(key)
    w1, b1 = linear_params(k1, 2 * n_node_features + n_edge_features, hiddens)
    w2, b2 = linear_params(k2, hiddens, n_targets)
    return (w1, b1, w2, b2)


# ----------------------------------------------------------------------------
# Demo
# ----------------------------------------------------------------------------
if __name__ == "__main__":
    key = jax.random.PRNGKey(0)
    kp, ks, kd, ke = jax.random.split(key, 4)

    n_node_features = 4
    n_edge_features = 3
    hiddens = 32
    n_targets = 32
    num_edges = 20            # not a multiple of the row tile -> exercises the
                              # un-padded partial-last-tile path

    params = edge_model_params(kp, n_node_features, n_edge_features, hiddens, n_targets)

    src = jax.random.normal(ks, (num_edges, n_node_features), jnp.float32)
    dest = jax.random.normal(kd, (num_edges, n_node_features), jnp.float32)
    edge_attr = jax.random.normal(ke, (num_edges, n_edge_features), jnp.float32)

    # Pure-JAX reference (same math as the torch module).
    w1, b1, w2, b2 = params
    ref = jnp.concatenate([src, dest, edge_attr], axis=1)
    ref = jnp.maximum(ref @ w1 + b1, 0.0) @ w2 + b2

    # --- f32 path (exact semantics check) ---
    fwd = jax.jit(lambda p, s, d, ea: edge_model_forward(s, d, ea, p))
    out = jax.block_until_ready(fwd(params, src, dest, edge_attr))
    assert out.shape == (num_edges, n_targets), out.shape
    assert jnp.allclose(out, ref, rtol=1e-5, atol=1e-5), float(jnp.abs(out - ref).max())

    # --- bf16 activation/weight path (halved HBM traffic; f32 accumulation) ---
    out_bf = jax.block_until_ready(
        fwd(params,
            src.astype(jnp.bfloat16),
            dest.astype(jnp.bfloat16),
            edge_attr.astype(jnp.bfloat16)))
    assert out_bf.shape == (num_edges, n_targets), out_bf.shape
    assert jnp.allclose(out_bf, ref, rtol=1e-1, atol=1e-1), float(jnp.abs(out_bf - ref).max())

    print("KERNEL_OK")
</pallas_src>

<mosaic_0001>
module attributes {stable_mosaic.version = 11 : i64} {
  func.func @_edge_mlp_kernel(%arg0: i32, %arg1: memref<8x4xf32, #tpu.memory_space<vmem>>, %arg2: memref<8x4xf32, #tpu.memory_space<vmem>>, %arg3: memref<8x3xf32, #tpu.memory_space<vmem>>, %arg4: memref<4x32xf32, #tpu.memory_space<vmem>>, %arg5: memref<4x32xf32, #tpu.memory_space<vmem>>, %arg6: memref<3x32xf32, #tpu.memory_space<vmem>>, %arg7: memref<1x32xf32, #tpu.memory_space<vmem>>, %arg8: memref<32x32xf32, #tpu.memory_space<vmem>>, %arg9: memref<1x32xf32, #tpu.memory_space<vmem>>, %arg10: memref<8x32xf32, #tpu.memory_space<vmem>>) attributes {dimension_semantics = [#tpu.dimension_semantics<parallel>], iteration_bounds = array<i64: 3>, scalar_prefetch = 0 : i64, scratch_operands = 0 : i64, tpu.core_type = #tpu.core_type<tc>, window_params = [{transform_indices = @transform_0, window_bounds = array<i64: 8, 4>}, {transform_indices = @transform_1, window_bounds = array<i64: 8, 4>}, {transform_indices = @transform_2, window_bounds = array<i64: 8, 3>}, {pipeline_mode = #tpu.pipeline_mode<synchronous>, transform_indices = @transform_3, window_bounds = array<i64: 4, 32>}, {pipeline_mode = #tpu.pipeline_mode<synchronous>, transform_indices = @transform_4, window_bounds = array<i64: 4, 32>}, {pipeline_mode = #tpu.pipeline_mode<synchronous>, transform_indices = @transform_5, window_bounds = array<i64: 3, 32>}, {pipeline_mode = #tpu.pipeline_mode<synchronous>, transform_indices = @transform_6, window_bounds = array<i64: 1, 32>}, {pipeline_mode = #tpu.pipeline_mode<synchronous>, transform_indices = @transform_7, window_bounds = array<i64: 32, 32>}, {pipeline_mode = #tpu.pipeline_mode<synchronous>, transform_indices = @transform_8, window_bounds = array<i64: 1, 32>}, {transform_indices = @transform_9, window_bounds = array<i64: 8, 32>}]} {
    %c0 = arith.constant 0 : index
    %c0_0 = arith.constant 0 : index
    %0 = vector.load %arg1[%c0, %c0_0] : memref<8x4xf32, #tpu.memory_space<vmem>>, vector<8x4xf32>
    %c0_1 = arith.constant 0 : index
    %c0_2 = arith.constant 0 : index
    %1 = vector.load %arg4[%c0_1, %c0_2] : memref<4x32xf32, #tpu.memory_space<vmem>>, vector<4x32xf32>
    %cst = arith.constant dense<0.000000e+00> : vector<8x32xf32>
    %2 = tpu.matmul %0, %1, %cst {dimension_numbers = #tpu.dot_dimension_numbers<[1], [0], [0], [1], [0, 0, 1, 1], [], []>} : vector<8x4xf32>, vector<4x32xf32>, vector<8x32xf32> -> vector<8x32xf32>
    %c0_3 = arith.constant 0 : index
    %c0_4 = arith.constant 0 : index
    %3 = vector.load %arg2[%c0_3, %c0_4] : memref<8x4xf32, #tpu.memory_space<vmem>>, vector<8x4xf32>
    %c0_5 = arith.constant 0 : index
    %c0_6 = arith.constant 0 : index
    %4 = vector.load %arg5[%c0_5, %c0_6] : memref<4x32xf32, #tpu.memory_space<vmem>>, vector<4x32xf32>
    %cst_7 = arith.constant dense<0.000000e+00> : vector<8x32xf32>
    %5 = tpu.matmul %3, %4, %cst_7 {dimension_numbers = #tpu.dot_dimension_numbers<[1], [0], [0], [1], [0, 0, 1, 1], [], []>} : vector<8x4xf32>, vector<4x32xf32>, vector<8x32xf32> -> vector<8x32xf32>
    %6 = arith.addf %2, %5 : vector<8x32xf32>
    %c0_8 = arith.constant 0 : index
    %c0_9 = arith.constant 0 : index
    %7 = vector.load %arg3[%c0_8, %c0_9] : memref<8x3xf32, #tpu.memory_space<vmem>>, vector<8x3xf32>
    %c0_10 = arith.constant 0 : index
    %c0_11 = arith.constant 0 : index
    %8 = vector.load %arg6[%c0_10, %c0_11] : memref<3x32xf32, #tpu.memory_space<vmem>>, vector<3x32xf32>
    %cst_12 = arith.constant dense<0.000000e+00> : vector<8x32xf32>
    %9 = tpu.matmul %7, %8, %cst_12 {dimension_numbers = #tpu.dot_dimension_numbers<[1], [0], [0], [1], [0, 0, 1, 1], [], []>} : vector<8x3xf32>, vector<3x32xf32>, vector<8x32xf32> -> vector<8x32xf32>
    %10 = arith.addf %6, %9 : vector<8x32xf32>
    %c0_13 = arith.constant 0 : index
    %c0_14 = arith.constant 0 : index
    %11 = vector.load %arg7[%c0_13, %c0_14] : memref<1x32xf32, #tpu.memory_space<vmem>>, vector<1x32xf32>
    %12 = vector.broadcast %11 : vector<1x32xf32> to vector<8x32xf32>
    %13 = arith.addf %10, %12 : vector<8x32xf32>
    %cst_15 = arith.constant 0.000000e+00 : f32
    %14 = vector.broadcast %cst_15 : f32 to vector<8x32xf32>
    %15 = arith.maximumf %13, %14 : vector<8x32xf32>
    %c0_16 = arith.constant 0 : index
    %c0_17 = arith.constant 0 : index
    %16 = vector.load %arg8[%c0_16, %c0_17] : memref<32x32xf32, #tpu.memory_space<vmem>>, vector<32x32xf32>
    %cst_18 = arith.constant dense<0.000000e+00> : vector<8x32xf32>
    %17 = tpu.matmul %15, %16, %cst_18 {dimension_numbers = #tpu.dot_dimension_numbers<[1], [0], [0], [1], [0, 0, 1, 1], [], []>} : vector<8x32xf32>, vector<32x32xf32>, vector<8x32xf32> -> vector<8x32xf32>
    %c0_19 = arith.constant 0 : index
    %c0_20 = arith.constant 0 : index
    %18 = vector.load %arg9[%c0_19, %c0_20] : memref<1x32xf32, #tpu.memory_space<vmem>>, vector<1x32xf32>
    %19 = vector.broadcast %18 : vector<1x32xf32> to vector<8x32xf32>
    %20 = arith.addf %17, %19 : vector<8x32xf32>
    %c0_21 = arith.constant 0 : index
    %c0_22 = arith.constant 0 : index
    %21 = vector.load %arg10[%c0_21, %c0_22] : memref<8x32xf32, #tpu.memory_space<vmem>>, vector<8x32xf32>
    tpu.vector_store %arg10[%c0_21, %c0_22], %20 {strides = array<i32>} : memref<8x32xf32, #tpu.memory_space<vmem>>, vector<8x32xf32>,
    return
  }
  func.func @transform_0(%arg0: i32) -> (i32, i32) {
    %c0_i32 = arith.constant 0 : i32
    %c0_i32_0 = arith.constant 0 : i32
    return %arg0, %c0_i32 : i32, i32
  }
  func.func @transform_1(%arg0: i32) -> (i32, i32) {
    %c0_i32 = arith.constant 0 : i32
    %c0_i32_0 = arith.constant 0 : i32
    return %arg0, %c0_i32 : i32, i32
  }
  func.func @transform_2(%arg0: i32) -> (i32, i32) {
    %c0_i32 = arith.constant 0 : i32
    %c0_i32_0 = arith.constant 0 : i32
    return %arg0, %c0_i32 : i32, i32
  }
  func.func @transform_3(%arg0: i32) -> (i32, i32) {
    %c0_i32 = arith.constant 0 : i32
    %c0_i32_0 = arith.constant 0 : i32
    %c0_i32_1 = arith.constant 0 : i32
    return %c0_i32, %c0_i32_0 : i32, i32
  }
  func.func @transform_4(%arg0: i32) -> (i32, i32) {
    %c0_i32 = arith.constant 0 : i32
    %c0_i32_0 = arith.constant 0 : i32
    %c0_i32_1 = arith.constant 0 : i32
    return %c0_i32, %c0_i32_0 : i32, i32
  }
  func.func @transform_5(%arg0: i32) -> (i32, i32) {
    %c0_i32 = arith.constant 0 : i32
    %c0_i32_0 = arith.constant 0 : i32
    %c0_i32_1 = arith.constant 0 : i32
    return %c0_i32, %c0_i32_0 : i32, i32
  }
  func.func @transform_6(%arg0: i32) -> (i32, i32) {
    %c0_i32 = arith.constant 0 : i32
    %c0_i32_0 = arith.constant 0 : i32
    %c0_i32_1 = arith.constant 0 : i32
    return %c0_i32, %c0_i32_0 : i32, i32
  }
  func.func @transform_7(%arg0: i32) -> (i32, i32) {
    %c0_i32 = arith.constant 0 : i32
    %c0_i32_0 = arith.constant 0 : i32
    %c0_i32_1 = arith.constant 0 : i32
    return %c0_i32, %c0_i32_0 : i32, i32
  }
  func.func @transform_8(%arg0: i32) -> (i32, i32) {
    %c0_i32 = arith.constant 0 : i32
    %c0_i32_0 = arith.constant 0 : i32
    %c0_i32_1 = arith.constant 0 : i32
    return %c0_i32, %c0_i32_0 : i32, i32
  }
  func.func @transform_9(%arg0: i32) -> (i32, i32) {
    %c0_i32 = arith.constant 0 : i32
    %c0_i32_0 = arith.constant 0 : i32
    return %arg0, %c0_i32 : i32, i32
  }
}

</mosaic_0001>

<llo_original>
// kernel: _lambda_.1
$region0: #{_lambda_.1}
  #allocation0 [shape = 'u32[]', space=smem, size = 0x4, offset = 0x4, fixed_abs, tag = 'smem constant byte address 0x4 - core index']
  #allocation1 [shape = 'u32[144,128]{1,0:T(1,128)}', space=vmem, size = 0x12000, scoped, tag = 'internal scratch']
  %s0 = inlined_call_operand.vmem [shape: f32[20,4], index: 0, kind: input, shape index: {}]
  %s1 = inlined_call_operand.vmem [shape: f32[20,4], index: 1, kind: input, shape index: {}]
  %s2 = inlined_call_operand.vmem [shape: f32[20,3], index: 2, kind: input, shape index: {}]
  %s3 = inlined_call_operand.vmem [shape: f32[4,32], index: 3, kind: input, shape index: {}]
  %s4 = inlined_call_operand.vmem [shape: f32[4,32], index: 4, kind: input, shape index: {}]
  %s5 = inlined_call_operand.vmem [shape: f32[3,32], index: 5, kind: input, shape index: {}]
  %s6 = inlined_call_operand.vmem [shape: f32[1,32], index: 6, kind: input, shape index: {}]
  %s7 = inlined_call_operand.vmem [shape: f32[32,32], index: 7, kind: input, shape index: {}]
  %s8 = inlined_call_operand.vmem [shape: f32[1,32], index: 8, kind: input, shape index: {}]
  %s9 = inlined_call_operand.hbm [shape: f32[20,32], index: 9, kind: output, shape index: {}]
  %s10 = sld [smem:[#allocation0]]
  $region69: #{_lambda_.1} parent=0
    _
  %s12 = ssub.s32 1, %s10
  %s13 = scalar_select 0, %s12, %s10
  $region1: #{_lambda_.1} parent=0
    #allocation2 [shape = 'u8[8192]{0}', space=vmem, size = 0x2000, scoped, tag = 'output window, operand 0']
    #allocation3 [shape = 's32[2]{0}', space=sflag, size = 0x8, scoped, tag = 'scoped memory for _lambda_.1']
    %14 = vsyncpa [#allocation3], 0
    %s15 = scalar_lea.sflag [#allocation3], 1
    %16 = vsyncpa %s15, 0
    loop: start=0, step=1, limit=5
    $region2: #{_lambda_.1} parent=1 // loop_pre_header
      _
    $region3: #{_lambda_.1} parent=1 // loop_header
      %s18 = sphi 0, %s22
      %p19 = scmp.ge.s32.totalorder %s18, 5
      %s28 = sphi 0, %s30
      %s31 = sphi 0, %s28
      %s32 = sphi 0, %s31
      %s48 = sphi 0, %s32
      %s54 = sphi 0, %s56
      %s57 = sphi 0, %s54
      %s58 = sphi 0, %s57
      %s74 = sphi 0, %s58
      %s80 = sphi 0, %s82
      %s83 = sphi 0, %s80
      %s84 = sphi 0, %s83
      %s100 = sphi 0, %s84
      %s104 = sphi 0, %s104
      %s106 = sphi 0, %s104
      %s107 = sphi 0, %s106
      %s121 = sphi 0, %s107
      %s125 = sphi 0, %s125
      %s127 = sphi 0, %s125
      %s128 = sphi 0, %s127
      %s142 = sphi 0, %s128
      %s146 = sphi 0, %s146
      %s148 = sphi 0, %s146
      %s149 = sphi 0, %s148
      %s163 = sphi 0, %s149
      %s167 = sphi 0, %s167
      %s169 = sphi 0, %s167
      %s170 = sphi 0, %s169
      %s184 = sphi 0, %s170
      %s188 = sphi 0, %s188
      %s190 = sphi 0, %s188
      %s191 = sphi 0, %s190
      %s205 = sphi 0, %s191
      %s209 = sphi 0, %s209
      %s211 = sphi 0, %s209
      %s212 = sphi 0, %s211
      %s226 = sphi 0, %s212
      %s232 = sphi 0, %s234
      %s235 = sphi 0, %s232
      %s236 = sphi 0, %s235
      %s252 = sphi 0, %s236
    $region4: #{_lambda_.1} parent=1 // loop_header_branch
      %21 = sbr.rel (%p19) target = $region8
    $region5: #{_lambda_.1} parent=1 // loop_body
      %s23 = ssub.s32 %s18, 1
      %s24 = ssub.s32 %s18, 2
      %s25 = sadd.s32 %s18, 1
      %s26 = ssub.s32 %s18, %s25
      %p27 = scmp.eq.s32.totalorder %s26, 0
      %s29 = sadd.s32 %s28, 1
      %s30 = scalar_select %p27, %s28, %s29
      %p33 = pneg %p27
      %p34 = scmp.eq.s32.totalorder %s18, 2
      %p35 = por %p33, %p34
      %p36 = scmp.ne.s32.totalorder %s28, %s31
      %p37 = scmp.eq.s32.totalorder %s18, 0
      %p38 = por %p36, %p37
      %p39 = scmp.ne.s32.totalorder %s28, %s31
      %p40 = scmp.eq.s32.totalorder %s23, 2
      %p41 = por %p39, %p40
      %p42 = scmp.ne.s32.totalorder %s31, %s32
      %p43 = scmp.eq.s32.totalorder %s23, 0
      %p44 = por %p42, %p43
      %p45 = scmp.ne.s32.totalorder %s31, %s32
      %p46 = scmp.eq.s32.totalorder %s24, 2
      %p47 = por %p45, %p46
      %p49 = scmp.ne.s32.totalorder %s32, %s48
      %p50 = scmp.eq.s32.totalorder %s24, 0
      %p51 = por %p49, %p50
      %s52 = ssub.s32 %s18, %s25
      %p53 = scmp.eq.s32.totalorder %s52, 0
      %s55 = sadd.s32 %s54, 1
      %s56 = scalar_select %p53, %s54, %s55
      %p59 = pneg %p53
      %p60 = scmp.eq.s32.totalorder %s18, 2
      %p61 = por %p59, %p60
      %p62 = scmp.ne.s32.totalorder %s54, %s57
      %p63 = scmp.eq.s32.totalorder %s18, 0
      %p64 = por %p62, %p63
      %p65 = scmp.ne.s32.totalorder %s54, %s57
      %p66 = scmp.eq.s32.totalorder %s23, 2
      %p67 = por %p65, %p66
      %p68 = scmp.ne.s32.totalorder %s57, %s58
      %p69 = scmp.eq.s32.totalorder %s23, 0
      %p70 = por %p68, %p69
      %p71 = scmp.ne.s32.totalorder %s57, %s58
      %p72 = scmp.eq.s32.totalorder %s24, 2
      %p73 = por %p71, %p72
      %p75 = scmp.ne.s32.totalorder %s58, %s74
      %p76 = scmp.eq.s32.totalorder %s24, 0
      %p77 = por %p75, %p76
      %s78 = ssub.s32 %s18, %s25
      %p79 = scmp.eq.s32.totalorder %s78, 0
      %s81 = sadd.s32 %s80, 1
      %s82 = scalar_select %p79, %s80, %s81
      %p85 = pneg %p79
      %p86 = scmp.eq.s32.totalorder %s18, 2
      %p87 = por %p85, %p86
      %p88 = scmp.ne.s32.totalorder %s80, %s83
      %p89 = scmp.eq.s32.totalorder %s18, 0
      %p90 = por %p88, %p89
      %p91 = scmp.ne.s32.totalorder %s80, %s83
      %p92 = scmp.eq.s32.totalorder %s23, 2
      %p93 = por %p91, %p92
      %p94 = scmp.ne.s32.totalorder %s83, %s84
      %p95 = scmp.eq.s32.totalorder %s23, 0
      %p96 = por %p94, %p95
      %p97 = scmp.ne.s32.totalorder %s83, %s84
      %p98 = scmp.eq.s32.totalorder %s24, 2
      %p99 = por %p97, %p98
      %p101 = scmp.ne.s32.totalorder %s84, %s100
      %p102 = scmp.eq.s32.totalorder %s24, 0
      %p103 = por %p101, %p102
      %s105 = sadd.s32 %s104, 1
      %p108 = scmp.eq.s32.totalorder %s18, 2
      %p109 = scmp.ne.s32.totalorder %s104, %s106
      %p110 = scmp.eq.s32.totalorder %s18, 0
      %p111 = por %p109, %p110
      %p112 = scmp.ne.s32.totalorder %s104, %s106
      %p113 = scmp.eq.s32.totalorder %s23, 2
      %p114 = por %p112, %p113
      %p115 = scmp.ne.s32.totalorder %s106, %s107
      %p116 = scmp.eq.s32.totalorder %s23, 0
      %p117 = por %p115, %p116
      %p118 = scmp.ne.s32.totalorder %s106, %s107
      %p119 = scmp.eq.s32.totalorder %s24, 2
      %p120 = por %p118, %p119
      %p122 = scmp.ne.s32.totalorder %s107, %s121
      %p123 = scmp.eq.s32.totalorder %s24, 0
      %p124 = por %p122, %p123
      %s126 = sadd.s32 %s125, 1
      %p129 = scmp.eq.s32.totalorder %s18, 2
      %p130 = scmp.ne.s32.totalorder %s125, %s127
      %p131 = scmp.eq.s32.totalorder %s18, 0
      %p132 = por %p130, %p131
      %p133 = scmp.ne.s32.totalorder %s125, %s127
      %p134 = scmp.eq.s32.totalorder %s23, 2
      %p135 = por %p133, %p134
      %p136 = scmp.ne.s32.totalorder %s127, %s128
      %p137 = scmp.eq.s32.totalorder %s23, 0
      %p138 = por %p136, %p137
      %p139 = scmp.ne.s32.totalorder %s127, %s128
      %p140 = scmp.eq.s32.totalorder %s24, 2
      %p141 = por %p139, %p140
      %p143 = scmp.ne.s32.totalorder %s128, %s142
      %p144 = scmp.eq.s32.totalorder %s24, 0
      %p145 = por %p143, %p144
      %s147 = sadd.s32 %s146, 1
      %p150 = scmp.eq.s32.totalorder %s18, 2
      %p151 = scmp.ne.s32.totalorder %s146, %s148
      %p152 = scmp.eq.s32.totalorder %s18, 0
      %p153 = por %p151, %p152
      %p154 = scmp.ne.s32.totalorder %s146, %s148
      %p155 = scmp.eq.s32.totalorder %s23, 2
      %p156 = por %p154, %p155
      %p157 = scmp.ne.s32.totalorder %s148, %s149
      %p158 = scmp.eq.s32.totalorder %s23, 0
      %p159 = por %p157, %p158
      %p160 = scmp.ne.s32.totalorder %s148, %s149
      %p161 = scmp.eq.s32.totalorder %s24, 2
      %p162 = por %p160, %p161
      %p164 = scmp.ne.s32.totalorder %s149, %s163
      %p165 = scmp.eq.s32.totalorder %s24, 0
      %p166 = por %p164, %p165
      %s168 = sadd.s32 %s167, 1
      %p171 = scmp.eq.s32.totalorder %s18, 2
      %p172 = scmp.ne.s32.totalorder %s167, %s169
      %p173 = scmp.eq.s32.totalorder %s18, 0
      %p174 = por %p172, %p173
      %p175 = scmp.ne.s32.totalorder %s167, %s169
      %p176 = scmp.eq.s32.totalorder %s23, 2
      %p177 = por %p175, %p176
      %p178 = scmp.ne.s32.totalorder %s169, %s170
      %p179 = scmp.eq.s32.totalorder %s23, 0
      %p180 = por %p178, %p179
      %p181 = scmp.ne.s32.totalorder %s169, %s170
      %p182 = scmp.eq.s32.totalorder %s24, 2
      %p183 = por %p181, %p182
      %p185 = scmp.ne.s32.totalorder %s170, %s184
      %p186 = scmp.eq.s32.totalorder %s24, 0
      %p187 = por %p185, %p186
      %s189 = sadd.s32 %s188, 1
      %p192 = scmp.eq.s32.totalorder %s18, 2
      %p193 = scmp.ne.s32.totalorder %s188, %s190
      %p194 = scmp.eq.s32.totalorder %s18, 0
      %p195 = por %p193, %p194
      %p196 = scmp.ne.s32.totalorder %s188, %s190
      %p197 = scmp.eq.s32.totalorder %s23, 2
      %p198 = por %p196, %p197
      %p199 = scmp.ne.s32.totalorder %s190, %s191
      %p200 = scmp.eq.s32.totalorder %s23, 0
      %p201 = por %p199, %p200
      %p202 = scmp.ne.s32.totalorder %s190, %s191
      %p203 = scmp.eq.s32.totalorder %s24, 2
      %p204 = por %p202, %p203
      %p206 = scmp.ne.s32.totalorder %s191, %s205
      %p207 = scmp.eq.s32.totalorder %s24, 0
      %p208 = por %p206, %p207
      %s210 = sadd.s32 %s209, 1
      %p213 = scmp.eq.s32.totalorder %s18, 2
      %p214 = scmp.ne.s32.totalorder %s209, %s211
      %p215 = scmp.eq.s32.totalorder %s18, 0
      %p216 = por %p214, %p215
      %p217 = scmp.ne.s32.totalorder %s209, %s211
      %p218 = scmp.eq.s32.totalorder %s23, 2
      %p219 = por %p217, %p218
      %p220 = scmp.ne.s32.totalorder %s211, %s212
      %p221 = scmp.eq.s32.totalorder %s23, 0
      %p222 = por %p220, %p221
      %p223 = scmp.ne.s32.totalorder %s211, %s212
      %p224 = scmp.eq.s32.totalorder %s24, 2
      %p225 = por %p223, %p224
      %p227 = scmp.ne.s32.totalorder %s212, %s226
      %p228 = scmp.eq.s32.totalorder %s24, 0
      %p229 = por %p227, %p228
      %s230 = ssub.s32 %s18, %s25
      %p231 = scmp.eq.s32.totalorder %s230, 0
      %s233 = sadd.s32 %s232, 1
      %s234 = scalar_select %p231, %s232, %s233
      %p237 = pneg %p231
      %p238 = scmp.eq.s32.totalorder %s18, 2
      %p239 = por %p237, %p238
      %p240 = scmp.ne.s32.totalorder %s232, %s235
      %p241 = scmp.eq.s32.totalorder %s18, 0
      %p242 = por %p240, %p241
      %p243 = scmp.ne.s32.totalorder %s232, %s235
      %p244 = scmp.eq.s32.totalorder %s23, 2
      %p245 = por %p243, %p244
      %p246 = scmp.ne.s32.totalorder %s235, %s236
      %p247 = scmp.eq.s32.totalorder %s23, 0
      %p248 = por %p246, %p247
      %p249 = scmp.ne.s32.totalorder %s235, %s236
      %p250 = scmp.eq.s32.totalorder %s24, 2
      %p251 = por %p249, %p250
      %p253 = scmp.ne.s32.totalorder %s236, %s252
      %p254 = scmp.eq.s32.totalorder %s24, 0
      %p255 = por %p253, %p254
      %p256 = scmp.le.s32.totalorder 1, %s18
      %p257 = scmp.lt.s32.totalorder %s18, 4
      %p258 = pnand %p256, %p257
      %p259 = pneg %p258
      // Predicated region
      $region9: #{_lambda_.1} parent=5 // pred_check
        _
      $region10: #{_lambda_.1} parent=5 // pred_check_branch
        %261 = sbr.rel (%p258) target = $region12
      $region11: #{_lambda_.1} parent=5 // pred_region
        %s262 = ssub.s32 %s18, 1
        // Predicated region
        $region13: #{_lambda_.1} parent=11 // pred_check
          %p263 = pneg %p117
        $region14: #{_lambda_.1} parent=11 // pred_check_branch
          %265 = sbr.rel (%p263) target = $region16
        $region15: #{_lambda_.1} parent=11 // pred_region
          _
        $region16: #{_lambda_.1} parent=11 // pred_fallthru
          _
        // Predicated region
        $region17: #{_lambda_.1} parent=11 // pred_check
          %p266 = pneg %p138
        $region18: #{_lambda_.1} parent=11 // pred_check_branch
          %268 = sbr.rel (%p266) target = $region20
        $region19: #{_lambda_.1} parent=11 // pred_region
          _
        $region20: #{_lambda_.1} parent=11 // pred_fallthru
          _
        // Predicated region
        $region21: #{_lambda_.1} parent=11 // pred_check
          %p269 = pneg %p159
        $region22: #{_lambda_.1} parent=11 // pred_check_branch
          %271 = sbr.rel (%p269) target = $region24
        $region23: #{_lambda_.1} parent=11 // pred_region
          _
        $region24: #{_lambda_.1} parent=11 // pred_fallthru
          _
        // Predicated region
        $region25: #{_lambda_.1} parent=11 // pred_check
          %p272 = pneg %p180
        $region26: #{_lambda_.1} parent=11 // pred_check_branch
          %274 = sbr.rel (%p272) target = $region28
        $region27: #{_lambda_.1} parent=11 // pred_region
          _
        $region28: #{_lambda_.1} parent=11 // pred_fallthru
          _
        // Predicated region
        $region29: #{_lambda_.1} parent=11 // pred_check
          %p275 = pneg %p201
        $region30: #{_lambda_.1} parent=11 // pred_check_branch
          %277 = sbr.rel (%p275) target = $region32
        $region31: #{_lambda_.1} parent=11 // pred_region
          _
        $region32: #{_lambda_.1} parent=11 // pred_fallthru
          _
        // Predicated region
        $region33: #{_lambda_.1} parent=11 // pred_check
          %p278 = pneg %p222
        $region34: #{_lambda_.1} parent=11 // pred_check_branch
          %280 = sbr.rel (%p278) target = $region36
        $region35: #{_lambda_.1} parent=11 // pred_region
          _
        $region36: #{_lambda_.1} parent=11 // pred_fallthru
          _
      $region12: #{_lambda_.1} parent=5 // pred_fallthru
        _
      %p281 = scmp.lt.s32.totalorder %s18, 3
      // Predicated region
      $region37: #{_lambda_.1} parent=5 // pred_check
        %p282 = pneg %p281
      $region38: #{_lambda_.1} parent=5 // pred_check_branch
        %284 = sbr.rel (%p282) target = $region40
      $region39: #{_lambda_.1} parent=5 // pred_region
        // Predicated region
        $region41: #{_lambda_.1} parent=39 // pred_check
          %p285 = pneg %p38
        $region42: #{_lambda_.1} parent=39 // pred_check_branch
          %287 = sbr.rel (%p285) target = $region44
        $region43: #{_lambda_.1} parent=39 // pred_region
          %p288 = scmp.lt.s32.totalorder %s18, 2
          %s289 = scalar_select %p288, %s18, 2
          %s290 = smul.addr %s289, 8
          %s291 = scalar_lea.vmem %s0, %s290
        $region44: #{_lambda_.1} parent=39 // pred_fallthru
          _
        // Predicated region
        $region45: #{_lambda_.1} parent=39 // pred_check
          %p292 = pneg %p64
        $region46: #{_lambda_.1} parent=39 // pred_check_branch
          %294 = sbr.rel (%p292) target = $region48
        $region47: #{_lambda_.1} parent=39 // pred_region
          %p295 = scmp.lt.s32.totalorder %s18, 2
          %s296 = scalar_select %p295, %s18, 2
          %s297 = smul.addr %s296, 8
          %s298 = scalar_lea.vmem %s1, %s297
        $region48: #{_lambda_.1} parent=39 // pred_fallthru
          _
        // Predicated region
        $region49: #{_lambda_.1} parent=39 // pred_check
          %p299 = pneg %p90
        $region50: #{_lambda_.1} parent=39 // pred_check_branch
          %301 = sbr.rel (%p299) target = $region52
        $region51: #{_lambda_.1} parent=39 // pred_region
          %p302 = scmp.lt.s32.totalorder %s18, 2
          %s303 = scalar_select %p302, %s18, 2
          %s304 = smul.addr %s303, 8
          %s305 = scalar_lea.vmem %s2, %s304
        $region52: #{_lambda_.1} parent=39 // pred_fallthru
          _
      $region40: #{_lambda_.1} parent=5 // pred_fallthru
        _
      %p306 = scmp.le.s32.totalorder 1, %s18
      %p307 = scmp.lt.s32.totalorder %s18, 4
      %p308 = pnand %p306, %p307
      %p309 = pneg %p308
      // Predicated region
      $region53: #{_lambda_.1} parent=5 // pred_check
        _
      $region54: #{_lambda_.1} parent=5 // pred_check_branch
        %311 = sbr.rel (%p308) target = $region56
      $region55: #{_lambda_.1} parent=5 // pred_region
        %s312 = ssub.s32 %s18, 1
        %p313 = scmp.lt.s32.totalorder %s23, 2
        %s314 = scalar_select %p313, %s23, 2
        %s315 = smul.addr %s314, 8
        %s316 = scalar_lea.vmem %s0, %s315
        %p317 = pneg %p44
        %p318 = pneg %p41
        %p319 = scmp.lt.s32.totalorder %s23, 2
        %s320 = scalar_select %p319, %s23, 2
        %s321 = smul.addr %s320, 8
        %s322 = scalar_lea.vmem %s1, %s321
        %p323 = pneg %p70
        %p324 = pneg %p67
        %p325 = scmp.lt.s32.totalorder %s23, 2
        %s326 = scalar_select %p325, %s23, 2
        %s327 = smul.addr %s326, 8
        %s328 = scalar_lea.vmem %s2, %s327
        %p329 = pneg %p96
        %p330 = pneg %p93
        %p331 = pneg %p117
        %p332 = pneg %p114
        %p333 = pneg %p138
        %p334 = pneg %p135
        %p335 = pneg %p159
        %p336 = pneg %p156
        %p337 = pneg %p180
        %p338 = pneg %p177
        %p339 = pneg %p201
        %p340 = pneg %p198
        %p341 = pneg %p222
        %p342 = pneg %p219
        %p343 = pneg %p248
        %p344 = pneg %p245
        %s345 = sand.u32 %s235, 1
        %s346 = scalar_lea.sflag [#allocation3], %s345
        %s347 = sand.u32 %s235, 1
        %s348 = smul.addr %s347, 8
        %s349 = scalar_lea.vmem [#allocation2], %s348
        %p350 = scmp.lt.s32.totalorder %s23, 2
        %s351 = scalar_select %p350, %s23, 2
        %s352 = smul.addr %s351, 8
        %s353 = scalar_lea.vmem %s0, %s352
        %p354 = scmp.lt.s32.totalorder %s23, 2
        %s355 = scalar_select %p354, %s23, 2
        %s356 = smul.addr %s355, 8
        %s357 = scalar_lea.vmem %s1, %s356
        %p358 = scmp.lt.s32.totalorder %s23, 2
        %s359 = scalar_select %p358, %s23, 2
        %s360 = smul.addr %s359, 8
        %s361 = scalar_lea.vmem %s2, %s360
        %v362 = vld [vmem:[%s353] sm:$0xff]
        %v363 = vld [vmem:[%s3] sm:$0xf]
        %v364 = vld [vmem:[%s357] sm:$0xff]
        %v365 = vld [vmem:[%s4] sm:$0xf]
        %vm366 = vcmask 31744
        %v368 = vsel %vm366, %v364, 0
        %vm370 = vcmask 1043456
        %v372 = vsel %vm370, %v365, 0
        %374 = vmatprep.subr.mxu0 0.0
        %375 = vmatpush1.msra.mxu0 %v372
        %376 = vmatprep.subr.mxu0 0.0
        %377 = vmatpush1.msra.mxu0 0.0
        %378 = vmatprep.subr.mxu0 0.0
        %379 = vmatpush1.msra.mxu0 0.0
        %380 = vmatprep.subr.mxu0 0.0
        %381 = vmatpush1.msra.mxu0 0.0
        %382 = vmatprep.subr.mxu0 0.0
        %383 = vmatpush1.msra.mxu0 0.0
        %384 = vmatprep.subr.mxu0 0.0
        %385 = vmatpush1.msra.mxu0 0.0
        %386 = vmatprep.subr.mxu0 0.0
        %387 = vmatpush1.msra.mxu0 0.0
        %388 = vmatprep.subr.mxu0 0.0
        %389 = vmatpush1.msra.mxu0 0.0
        %390 = vmatprep.subr.mxu0 0.0
        %391 = vmatpush1.msra.mxu0 0.0
        %392 = vmatprep.subr.mxu0 0.0
        %393 = vmatpush1.msra.mxu0 0.0
        %394 = vmatprep.subr.mxu0 0.0
        %395 = vmatpush1.msra.mxu0 0.0
        %396 = vmatprep.subr.mxu0 0.0
        %397 = vmatpush1.msra.mxu0 0.0
        %398 = vmatprep.subr.mxu0 0.0
        %399 = vmatpush1.msra.mxu0 0.0
        %400 = vmatprep.subr.mxu0 0.0
        %401 = vmatpush1.msra.mxu0 0.0
        %402 = vmatprep.subr.mxu0 0.0
        %403 = vmatpush1.msra.mxu0 0.0
        %404 = vmatprep.subr.mxu0 0.0
        %405 = vmatpush1.msra.mxu0 0.0
        %406 = vmatprep.subr.mxu0 0.0
        %407 = vmatpush1.msra.mxu0 0.0
        %408 = vmatprep.subr.mxu0 0.0
        %409 = vmatpush1.msra.mxu0 0.0
        %410 = vmatprep.subr.mxu0 0.0
        %411 = vmatpush1.msra.mxu0 0.0
        %412 = vmatprep.subr.mxu0 0.0
        %413 = vmatpush1.msra.mxu0 0.0
        %414 = vmatprep.subr.mxu0 0.0
        %415 = vmatpush1.msra.mxu0 0.0
        %416 = vmatprep.subr.mxu0 0.0
        %417 = vmatpush1.msra.mxu0 0.0
        %418 = vmatprep.subr.mxu0 0.0
        %419 = vmatpush1.msra.mxu0 0.0
        %420 = vmatprep.subr.mxu0 0.0
        %421 = vmatpush1.msra.mxu0 0.0
        %422 = vmatprep.subr.mxu0 0.0
        %423 = vmatpush1.msra.mxu0 0.0
        %424 = vmatprep.subr.mxu0 0.0
        %425 = vmatpush1.msra.mxu0 0.0
        %426 = vmatprep.subr.mxu0 0.0
        %427 = vmatpush1.msra.mxu0 0.0
        %428 = vmatprep.subr.mxu0 0.0
        %429 = vmatpush1.msra.mxu0 0.0
        %430 = vmatprep.subr.mxu0 0.0
        %431 = vmatpush1.msra.mxu0 0.0
        %432 = vmatprep.subr.mxu0 0.0
        %433 = vmatpush1.msra.mxu0 0.0
        %434 = vmatprep.subr.mxu0 0.0
        %435 = vmatpush1.msra.mxu0 0.0
        %436 = vmatprep.subr.mxu0 0.0
        %437 = vmatpush1.msra.mxu0 0.0
        %438 = vmatprep.mubr.f32.mxu0 0.0
        %439 = vmatmul.mubr.f32.gmra.mrb[0].mxu0 %v368
        %v440 = vpop.f32.mrb[0].mxu0
        %v441 = vadd.f32 0.0, %v440
        %v442 = vpop.f32.mrb[0].mxu0
        %443 = vdwg.mxu0
        %v445 = vsel %vm366, %v362, 0
        %v448 = vsel %vm370, %v363, 0
        %450 = vmatprep.subr.mxu0 0.0
        %451 = vmatpush1.msra.mxu0 %v448
        %452 = vmatprep.subr.mxu0 0.0
        %453 = vmatpush1.msra.mxu0 0.0
        %454 = vmatprep.subr.mxu0 0.0
        %455 = vmatpush1.msra.mxu0 0.0
        %456 = vmatprep.subr.mxu0 0.0
        %457 = vmatpush1.msra.mxu0 0.0
        %458 = vmatprep.subr.mxu0 0.0
        %459 = vmatpush1.msra.mxu0 0.0
        %460 = vmatprep.subr.mxu0 0.0
        %461 = vmatpush1.msra.mxu0 0.0
        %462 = vmatprep.subr.mxu0 0.0
        %463 = vmatpush1.msra.mxu0 0.0
        %464 = vmatprep.subr.mxu0 0.0
        %465 = vmatpush1.msra.mxu0 0.0
        %466 = vmatprep.subr.mxu0 0.0
        %467 = vmatpush1.msra.mxu0 0.0
        %468 = vmatprep.subr.mxu0 0.0
        %469 = vmatpush1.msra.mxu0 0.0
        %470 = vmatprep.subr.mxu0 0.0
        %471 = vmatpush1.msra.mxu0 0.0
        %472 = vmatprep.subr.mxu0 0.0
        %473 = vmatpush1.msra.mxu0 0.0
        %474 = vmatprep.subr.mxu0 0.0
        %475 = vmatpush1.msra.mxu0 0.0
        %476 = vmatprep.subr.mxu0 0.0
        %477 = vmatpush1.msra.mxu0 0.0
        %478 = vmatprep.subr.mxu0 0.0
        %479 = vmatpush1.msra.mxu0 0.0
        %480 = vmatprep.subr.mxu0 0.0
        %481 = vmatpush1.msra.mxu0 0.0
        %482 = vmatprep.subr.mxu0 0.0
        %483 = vmatpush1.msra.mxu0 0.0
        %484 = vmatprep.subr.mxu0 0.0
        %485 = vmatpush1.msra.mxu0 0.0
        %486 = vmatprep.subr.mxu0 0.0
        %487 = vmatpush1.msra.mxu0 0.0
        %488 = vmatprep.subr.mxu0 0.0
        %489 = vmatpush1.msra.mxu0 0.0
        %490 = vmatprep.subr.mxu0 0.0
        %491 = vmatpush1.msra.mxu0 0.0
        %492 = vmatprep.subr.mxu0 0.0
        %493 = vmatpush1.msra.mxu0 0.0
        %494 = vmatprep.subr.mxu0 0.0
        %495 = vmatpush1.msra.mxu0 0.0
        %496 = vmatprep.subr.mxu0 0.0
        %497 = vmatpush1.msra.mxu0 0.0
        %498 = vmatprep.subr.mxu0 0.0
        %499 = vmatpush1.msra.mxu0 0.0
        %500 = vmatprep.subr.mxu0 0.0
        %501 = vmatpush1.msra.mxu0 0.0
        %502 = vmatprep.subr.mxu0 0.0
        %503 = vmatpush1.msra.mxu0 0.0
        %504 = vmatprep.subr.mxu0 0.0
        %505 = vmatpush1.msra.mxu0 0.0
        %506 = vmatprep.subr.mxu0 0.0
        %507 = vmatpush1.msra.mxu0 0.0
        %508 = vmatprep.subr.mxu0 0.0
        %509 = vmatpush1.msra.mxu0 0.0
        %510 = vmatprep.subr.mxu0 0.0
        %511 = vmatpush1.msra.mxu0 0.0
        %512 = vmatprep.subr.mxu0 0.0
        %513 = vmatpush1.msra.mxu0 0.0
        %514 = vmatprep.mubr.f32.mxu0 0.0
        %515 = vmatmul.mubr.f32.gmra.mrb[0].mxu0 %v445
        %v516 = vpop.f32.mrb[0].mxu0
        %v517 = vadd.f32 %v441, %v516
        %v518 = vpop.f32.mrb[0].mxu0
        %519 = vdwg.mxu0
        %v520 = vld [vmem:[%s361] sm:$0xff]
        %v521 = vld [vmem:[%s5] sm:$0x7]
        %vm522 = vcmask 23552
        %v524 = vsel %vm522, %v520, 0
        %vm526 = vcmask 1042432
        %v528 = vsel %vm526, %v521, 0
        %530 = vmatprep.subr.mxu0 0.0
        %531 = vmatpush1.msra.mxu0 %v528
        %532 = vmatprep.subr.mxu0 0.0
        %533 = vmatpush1.msra.mxu0 0.0
        %534 = vmatprep.subr.mxu0 0.0
        %535 = vmatpush1.msra.mxu0 0.0
        %536 = vmatprep.subr.mxu0 0.0
        %537 = vmatpush1.msra.mxu0 0.0
        %538 = vmatprep.subr.mxu0 0.0
        %539 = vmatpush1.msra.mxu0 0.0
        %540 = vmatprep.subr.mxu0 0.0
        %541 = vmatpush1.msra.mxu0 0.0
        %542 = vmatprep.subr.mxu0 0.0
        %543 = vmatpush1.msra.mxu0 0.0
        %544 = vmatprep.subr.mxu0 0.0
        %545 = vmatpush1.msra.mxu0 0.0
        %546 = vmatprep.subr.mxu0 0.0
        %547 = vmatpush1.msra.mxu0 0.0
        %548 = vmatprep.subr.mxu0 0.0
        %549 = vmatpush1.msra.mxu0 0.0
        %550 = vmatprep.subr.mxu0 0.0
        %551 = vmatpush1.msra.mxu0 0.0
        %552 = vmatprep.subr.mxu0 0.0
        %553 = vmatpush1.msra.mxu0 0.0
        %554 = vmatprep.subr.mxu0 0.0
        %555 = vmatpush1.msra.mxu0 0.0
        %556 = vmatprep.subr.mxu0 0.0
        %557 = vmatpush1.msra.mxu0 0.0
        %558 = vmatprep.subr.mxu0 0.0
        %559 = vmatpush1.msra.mxu0 0.0
        %560 = vmatprep.subr.mxu0 0.0
        %561 = vmatpush1.msra.mxu0 0.0
        %562 = vmatprep.subr.mxu0 0.0
        %563 = vmatpush1.msra.mxu0 0.0
        %564 = vmatprep.subr.mxu0 0.0
        %565 = vmatpush1.msra.mxu0 0.0
        %566 = vmatprep.subr.mxu0 0.0
        %567 = vmatpush1.msra.mxu0 0.0
        %568 = vmatprep.subr.mxu0 0.0
        %569 = vmatpush1.msra.mxu0 0.0
        %570 = vmatprep.subr.mxu0 0.0
        %571 = vmatpush1.msra.mxu0 0.0
        %572 = vmatprep.subr.mxu0 0.0
        %573 = vmatpush1.msra.mxu0 0.0
        %574 = vmatprep.subr.mxu0 0.0
        %575 = vmatpush1.msra.mxu0 0.0
        %576 = vmatprep.subr.mxu0 0.0
        %577 = vmatpush1.msra.mxu0 0.0
        %578 = vmatprep.subr.mxu0 0.0
        %579 = vmatpush1.msra.mxu0 0.0
        %580 = vmatprep.subr.mxu0 0.0
        %581 = vmatpush1.msra.mxu0 0.0
        %582 = vmatprep.subr.mxu0 0.0
        %583 = vmatpush1.msra.mxu0 0.0
        %584 = vmatprep.subr.mxu0 0.0
        %585 = vmatpush1.msra.mxu0 0.0
        %586 = vmatprep.subr.mxu0 0.0
        %587 = vmatpush1.msra.mxu0 0.0
        %588 = vmatprep.subr.mxu0 0.0
        %589 = vmatpush1.msra.mxu0 0.0
        %590 = vmatprep.subr.mxu0 0.0
        %591 = vmatpush1.msra.mxu0 0.0
        %592 = vmatprep.subr.mxu0 0.0
        %593 = vmatpush1.msra.mxu0 0.0
        %594 = vmatprep.mubr.f32.mxu0 0.0
        %595 = vmatmul.mubr.f32.gmra.mrb[0].mxu0 %v524
        %v596 = vpop.f32.mrb[0].mxu0
        %v597 = vadd.f32 0.0, %v596
        %v598 = vpop.f32.mrb[0].mxu0
        %599 = vdwg.mxu0
        %v600 = vadd.f32 %v517, %v597
        %v601 = vld [vmem:[%s6] sm:$0x1]
        %v603 = vlaneseq
        %v604 = vshrl.u32 %v603, 7
        %v605 = vsub.s32 0, %v604
        %v606 = vrot.slane %v601, %v605
        %v608 = vadd.f32 %v600, %v606
        %v609 = vmax.f32 %v608, 0.0
        %v610 = vld [vmem:[%s7] sm:$0xff]
        %v611 = vld [vmem:[%s7 + $0x8] sm:$0xff]
        %v612 = vld [vmem:[%s7 + $0x10] sm:$0xff]
        %v613 = vld [vmem:[%s7 + $0x18] sm:$0xff]
        %v614 = vld [vmem:[%s8] sm:$0x1]
        %v616 = vlaneseq
        %v617 = vshrl.u32 %v616, 7
        %v618 = vsub.s32 0, %v617
        %v619 = vrot.slane %v614, %v618
        %vm621 = vcmask 261120
        %v623 = vsel %vm621, %v609, 0
        %625 = vmatprep.subr.mxu0 0.0
        %626 = vmatpush1.msra.mxu0 %v610
        %627 = vmatprep.subr.mxu0 0.0
        %628 = vmatpush1.msra.mxu0 %v611
        %629 = vmatprep.subr.mxu0 0.0
        %630 = vmatpush1.msra.mxu0 %v612
        %631 = vmatprep.subr.mxu0 0.0
        %632 = vmatpush1.msra.mxu0 %v613
        %633 = vmatprep.subr.mxu0 0.0
        %634 = vmatpush1.msra.mxu0 0.0
        %635 = vmatprep.subr.mxu0 0.0
        %636 = vmatpush1.msra.mxu0 0.0
        %637 = vmatprep.subr.mxu0 0.0
        %638 = vmatpush1.msra.mxu0 0.0
        %639 = vmatprep.subr.mxu0 0.0
        %640 = vmatpush1.msra.mxu0 0.0
        %641 = vmatprep.subr.mxu0 0.0
        %642 = vmatpush1.msra.mxu0 0.0
        %643 = vmatprep.subr.mxu0 0.0
        %644 = vmatpush1.msra.mxu0 0.0
        %645 = vmatprep.subr.mxu0 0.0
        %646 = vmatpush1.msra.mxu0 0.0
        %647 = vmatprep.subr.mxu0 0.0
        %648 = vmatpush1.msra.mxu0 0.0
        %649 = vmatprep.subr.mxu0 0.0
        %650 = vmatpush1.msra.mxu0 0.0
        %651 = vmatprep.subr.mxu0 0.0
        %652 = vmatpush1.msra.mxu0 0.0
        %653 = vmatprep.subr.mxu0 0.0
        %654 = vmatpush1.msra.mxu0 0.0
        %655 = vmatprep.subr.mxu0 0.0
        %656 = vmatpush1.msra.mxu0 0.0
        %657 = vmatprep.subr.mxu0 0.0
        %658 = vmatpush1.msra.mxu0 0.0
        %659 = vmatprep.subr.mxu0 0.0
        %660 = vmatpush1.msra.mxu0 0.0
        %661 = vmatprep.subr.mxu0 0.0
        %662 = vmatpush1.msra.mxu0 0.0
        %663 = vmatprep.subr.mxu0 0.0
        %664 = vmatpush1.msra.mxu0 0.0
        %665 = vmatprep.subr.mxu0 0.0
        %666 = vmatpush1.msra.mxu0 0.0
        %667 = vmatprep.subr.mxu0 0.0
        %668 = vmatpush1.msra.mxu0 0.0
        %669 = vmatprep.subr.mxu0 0.0
        %670 = vmatpush1.msra.mxu0 0.0
        %671 = vmatprep.subr.mxu0 0.0
        %672 = vmatpush1.msra.mxu0 0.0
        %673 = vmatprep.subr.mxu0 0.0
        %674 = vmatpush1.msra.mxu0 0.0
        %675 = vmatprep.subr.mxu0 0.0
        %676 = vmatpush1.msra.mxu0 0.0
        %677 = vmatprep.subr.mxu0 0.0
        %678 = vmatpush1.msra.mxu0 0.0
        %679 = vmatprep.subr.mxu0 0.0
        %680 = vmatpush1.msra.mxu0 0.0
        %681 = vmatprep.subr.mxu0 0.0
        %682 = vmatpush1.msra.mxu0 0.0
        %683 = vmatprep.subr.mxu0 0.0
        %684 = vmatpush1.msra.mxu0 0.0
        %685 = vmatprep.subr.mxu0 0.0
        %686 = vmatpush1.msra.mxu0 0.0
        %687 = vmatprep.subr.mxu0 0.0
        %688 = vmatpush1.msra.mxu0 0.0
        %689 = vmatprep.mubr.f32.mxu0 0.0
        %690 = vmatmul.mubr.f32.gmra.mrb[0].mxu0 %v623
        %v691 = vpop.f32.mrb[0].mxu0
        %v692 = vadd.f32 %v619, %v691
        %v693 = vpop.f32.mrb[0].mxu0
        %694 = vdwg.mxu0
        %695 = vst.msk [vmem:[%s349] sm:$0xff] %vm621, %v692
        %s696 = sand.u32 %s235, 1
        %s697 = scalar_lea.sflag [#allocation3], %s696
        %s698 = sand.u32 %s235, 1
        %s699 = smul.addr %s698, 8
        %s700 = scalar_lea.vmem [#allocation2], %s699
        // Predicated region
        $region57: #{_lambda_.1} parent=55 // pred_check
          %p701 = pneg %p245
        $region58: #{_lambda_.1} parent=55 // pred_check_branch
          %703 = sbr.rel (%p701) target = $region60
        $region59: #{_lambda_.1} parent=55 // pred_region
          %s705 = ssub.s32 128, 128
          %706 = vsyncadd %s697, %s705
          %s707 = smul.addr %s23, 128
          %s708 = scalar_lea.hbm %s9, %s707
          %s710 = sshll.u32 %s700, 4
          %s711 = int_to_ptr.vmem [resolvable:$true] %s710
          %713 = dma.vmem_to_hbm [thread:$0]  %s711, 128, %s708, %s697
        $region60: #{_lambda_.1} parent=55 // pred_fallthru
          _
      $region56: #{_lambda_.1} parent=5 // pred_fallthru
        _
      %p714 = scmp.le.s32.totalorder 2, %s18
      // Predicated region
      $region61: #{_lambda_.1} parent=5 // pred_check
        %p715 = pneg %p714
      $region62: #{_lambda_.1} parent=5 // pred_check_branch
        %717 = sbr.rel (%p715) target = $region64
      $region63: #{_lambda_.1} parent=5 // pred_region
        %s718 = ssub.s32 %s18, 2
        // Predicated region
        $region65: #{_lambda_.1} parent=63 // pred_check
          %p719 = pneg %p251
        $region66: #{_lambda_.1} parent=63 // pred_check_branch
          %721 = sbr.rel (%p719) target = $region68
        $region67: #{_lambda_.1} parent=63 // pred_region
          %s722 = sand.u32 %s236, 1
          %s723 = scalar_lea.sflag [#allocation3], %s722
          %s724 = sand.u32 %s236, 1
          %s725 = smul.addr %s724, 8
          %s726 = scalar_lea.vmem [#allocation2], %s725
          %727 = dma.done %s723, 128
        $region68: #{_lambda_.1} parent=63 // pred_fallthru
          _
      $region64: #{_lambda_.1} parent=5 // pred_fallthru
        _
    $region6: #{_lambda_.1} parent=1 // loop_footer
      %s22 = sadd.s32 1, %s18
    $region7: #{_lambda_.1} parent=1 // loop_footer_branch
      %17 = sbr.rel target = $region3
    $region8: #{_lambda_.1} parent=1 // loop_exit
      _
    %728 = vsyncpa [#allocation3], 1
    %s729 = scalar_lea.sflag [#allocation3], 1
    %730 = vsyncpa %s729, 1

</llo_original>
